<compile_context>
chip_gen: v6e
topology: v6e:2x2x1
jax: 0.10.0
libtpu: 0.0.40
codegen_flags: <defaults>
</compile_context>

<pallas_src>
import jax
import jax.numpy as jnp
from jax.experimental import pallas as pl
from jax.experimental.pallas import tpu as pltpu

F_IN = 21 * 21          # 441
HIDDEN = 64
LANE = 128
DEFAULT_TILE_N = 2048   # rows per grid step (v5e/v6e); v7x default bumps to 4096


def _device_kind() -> str:
    try:
        return jax.devices()[0].device_kind.lower()
    except Exception:
        return ""


def _is_v7_class(kind: str) -> bool:
    return ("v7" in kind) or ("7x" in kind)


def _has_bf16_eup(kind: str) -> bool:
    # bf16 EUP/VPU paths exist on v6e and later; v5e and earlier have none.
    return ("v6" in kind) or ("6e" in kind) or _is_v7_class(kind)


def make_mlp_kernel(use_bf16_exp: bool):
    """Build the fused kernel; `use_bf16_exp` is a trace-time (static) flag."""

    def mlp_kernel(logits_ref, w1_ref, b1_ref, w2_ref, b2_ref, w3_ref, b3_ref,
                   out_ref):
        # ---- softmax numerator (normalization deferred past matmul #1) ----
        x = logits_ref[...].astype(jnp.float32)                  # [T, 441]
        m = jnp.max(x, axis=-1, keepdims=True)                   # XLU reduce

        if use_bf16_exp:
            # v6e / v7x: bf16 EUP exp; denominator accumulated in f32.
            e = jnp.exp((x - m).astype(jnp.bfloat16))            # [T, 441] bf16
            denom = jnp.sum(e.astype(jnp.float32), axis=-1, keepdims=True)
            e_mxu = e                                            # already bf16
        else:
            # v5e: no bf16 EUP/VPU path -> keep exp in f32.
            e = jnp.exp(x - m)                                   # [T, 441] f32
            denom = jnp.sum(e, axis=-1, keepdims=True)
            e_mxu = e.astype(jnp.bfloat16)

        inv = pl.reciprocal(denom, approx=True)                  # [T, 1], EUP

        # ---- Linear(441 -> 64) + deferred normalization + ReLU ----
        h1 = jnp.dot(e_mxu, w1_ref[...],
                     preferred_element_type=jnp.float32)         # [T, 64]
        h1 = jnp.maximum(h1 * inv + b1_ref[...], 0.0)            # scale 64-wide

        # ---- Linear(64 -> 64) + ReLU ----
        h2 = jnp.dot(h1.astype(jnp.bfloat16), w2_ref[...],
                     preferred_element_type=jnp.float32)
        h2 = jnp.maximum(h2 + b2_ref[...], 0.0)                  # [T, 64]

        # ---- Linear(64 -> out_dim) ----
        out = jnp.dot(h2.astype(jnp.bfloat16), w3_ref[...],
                      preferred_element_type=jnp.float32)
        out_ref[...] = (out + b3_ref[...]).astype(out_ref.dtype)  # [T, out_dim]

    return mlp_kernel


def mlp_forward(dense_map, sparse_map, logits, params, *, tile_n=None):
    """Pallas-fused MLP forward. dense_map / sparse_map are unused (as in ref)."""
    del dense_map, sparse_map  # reference forward ignores them
    w1, b1, w2, b2, w3, b3 = params
    n, f = logits.shape
    assert f == F_IN, f
    out_dim = w3.shape[1]

    kind = _device_kind()
    use_bf16_exp = _has_bf16_eup(kind)

    # MXU operands in bf16 (weights are tiny; cast once here). Biases stay f32.
    w1b = w1.astype(jnp.bfloat16)
    w2b = w2.astype(jnp.bfloat16)
    w3b = w3.astype(jnp.bfloat16)

    # Tile the batch: multiple of 8 sublanes, never larger than the batch.
    if tile_n is None:
        tile_n = 4096 if _is_v7_class(kind) else DEFAULT_TILE_N
    tile = max(8, (min(tile_n, n) // 8) * 8)
    grid = (pl.cdiv(n, tile),)

    logits_spec = pl.BlockSpec((tile, F_IN), lambda i: (i, 0))
    out_spec = pl.BlockSpec((tile, out_dim), lambda i: (i, 0))

    def resident(shape):
        # Full-array block, constant index_map -> DMA'd once, stays in VMEM.
        return pl.BlockSpec(shape, lambda i: (0, 0))

    # VMEM budget: double-buffered (lane-padded) logits + out tiles, plus
    # resident weights and headroom. Clamp to [32 MiB, 48 MiB] (v7x phys 64).
    f_in_pad = pl.cdiv(F_IN, LANE) * LANE                     # 512 lanes
    out_pad = pl.cdiv(out_dim, LANE) * LANE                   # >=128 lanes
    logits_buf = tile * f_in_pad * jnp.dtype(logits.dtype).itemsize
    out_buf = tile * out_pad * 4
    weights_buf = 2 * (F_IN * HIDDEN + HIDDEN * HIDDEN + HIDDEN * out_dim) \
        + 4 * (2 * HIDDEN + out_dim)
    vmem_est = 2 * (logits_buf + out_buf) + weights_buf + (2 << 20)
    vmem_limit = int(min(48 * 1024 * 1024,
                         max(32 * 1024 * 1024, vmem_est * 3 // 2)))

    flops = 2 * n * (F_IN * HIDDEN + HIDDEN * HIDDEN + HIDDEN * out_dim)
    transcendentals = n * (F_IN + 1)                     # exp row + reciprocal
    bytes_accessed = (n * F_IN * jnp.dtype(logits.dtype).itemsize  # logits in
                      + n * out_dim * 4                            # out
                      + 2 * (F_IN * HIDDEN + HIDDEN * HIDDEN + HIDDEN * out_dim)
                      + 4 * (2 * HIDDEN + out_dim))                # weights+biases

    return pl.pallas_call(
        make_mlp_kernel(use_bf16_exp),
        out_shape=jax.ShapeDtypeStruct((n, out_dim), jnp.float32),
        grid_spec=pltpu.PrefetchScalarGridSpec(
            num_scalar_prefetch=0,
            grid=grid,
            in_specs=[
                logits_spec,
                resident((F_IN, HIDDEN)), resident((1, HIDDEN)),
                resident((HIDDEN, HIDDEN)), resident((1, HIDDEN)),
                resident((HIDDEN, out_dim)), resident((1, out_dim)),
            ],
            out_specs=out_spec,
        ),
        compiler_params=pltpu.CompilerParams(
            dimension_semantics=("parallel",),   # batch axis across v7x TCs
            vmem_limit_bytes=vmem_limit,
        ),
        cost_estimate=pl.CostEstimate(
            flops=flops,
            transcendentals=transcendentals,
            bytes_accessed=bytes_accessed,
        ),
    )(logits, w1b, b1, w2b, b2, w3b, b3)


def init_params(key, out_dim):
    """Deterministic synthetic parameters (same shapes as the nn.Linear stack).

    PyTorch nn.Linear stores weight as [out, in]; we keep the transposed
    [in, out] layout so the kernel computes x @ W directly (same math).
    Biases are kept as [1, out] rows for TPU-friendly broadcasting.
    """
    k1, k2, k3, k4, k5, k6 = jax.random.split(key, 6)
    w1 = jax.random.normal(k1, (F_IN, HIDDEN), jnp.float32) * 0.02
    b1 = jax.random.normal(k2, (1, HIDDEN), jnp.float32) * 0.01
    w2 = jax.random.normal(k3, (HIDDEN, HIDDEN), jnp.float32) * 0.02
    b2 = jax.random.normal(k4, (1, HIDDEN), jnp.float32) * 0.01
    w3 = jax.random.normal(k5, (HIDDEN, out_dim), jnp.float32) * 0.02
    b3 = jax.random.normal(k6, (1, out_dim), jnp.float32) * 0.01
    return (w1, b1, w2, b2, w3, b3)


def mlp_reference(logits, params):
    """Plain-JAX f32 reference for the correctness check."""
    w1, b1, w2, b2, w3, b3 = params
    p = jax.nn.softmax(logits, axis=-1)
    h1 = jnp.maximum(p @ w1 + b1, 0.0)
    h2 = jnp.maximum(h1 @ w2 + b2, 0.0)
    return h2 @ w3 + b3


if __name__ == "__main__":
    key = jax.random.PRNGKey(0)
    k_params, k_dense, k_sparse, k_logits = jax.random.split(key, 4)

    # Small demo shapes; tile_n=32 forces a 4-step pipelined grid so the
    # batch tiling / resident-weight path is actually exercised.
    N = 128
    OUT_DIM = 16

    params = init_params(k_params, OUT_DIM)
    dense_map = jax.random.normal(k_dense, (N, F_IN, 6), jnp.float32)
    sparse_map = jax.random.normal(k_sparse, (N, F_IN, 6), jnp.float32)
    logits = jax.random.normal(k_logits, (N, F_IN), jnp.float32)

    out = mlp_forward(dense_map, sparse_map, logits, params, tile_n=32)
    out = jax.block_until_ready(out)

    ref = mlp_reference(logits, params)
    assert out.shape == (N, OUT_DIM), out.shape

    # Relative + absolute tolerance (bf16 MXU operands, bf16 exp on v6e+/v7x,
    # approx EUP reciprocal vs. an f32 reference).
    err = jnp.abs(out - ref)
    tol = 2e-3 + 3e-2 * jnp.abs(ref)
    assert bool(jnp.all(err <= tol)), float(jnp.max(err / (jnp.abs(ref) + 1e-6)))

    print("KERNEL_OK")
</pallas_src>

<mosaic_0001>
module attributes {stable_mosaic.version = 11 : i64} {
  func.func @mlp_kernel(%arg0: i32, %arg1: memref<32x441xf32, #tpu.memory_space<vmem>>, %arg2: memref<441x64xbf16, #tpu.memory_space<vmem>>, %arg3: memref<1x64xf32, #tpu.memory_space<vmem>>, %arg4: memref<64x64xbf16, #tpu.memory_space<vmem>>, %arg5: memref<1x64xf32, #tpu.memory_space<vmem>>, %arg6: memref<64x16xbf16, #tpu.memory_space<vmem>>, %arg7: memref<1x16xf32, #tpu.memory_space<vmem>>, %arg8: memref<32x16xf32, #tpu.memory_space<vmem>>) attributes {dimension_semantics = [#tpu.dimension_semantics<parallel>], iteration_bounds = array<i64: 4>, scalar_prefetch = 0 : i64, scratch_operands = 0 : i64, tpu.core_type = #tpu.core_type<tc>, window_params = [{transform_indices = @transform_0, window_bounds = array<i64: 32, 441>}, {pipeline_mode = #tpu.pipeline_mode<synchronous>, transform_indices = @transform_1, window_bounds = array<i64: 441, 64>}, {pipeline_mode = #tpu.pipeline_mode<synchronous>, transform_indices = @transform_2, window_bounds = array<i64: 1, 64>}, {pipeline_mode = #tpu.pipeline_mode<synchronous>, transform_indices = @transform_3, window_bounds = array<i64: 64, 64>}, {pipeline_mode = #tpu.pipeline_mode<synchronous>, transform_indices = @transform_4, window_bounds = array<i64: 1, 64>}, {pipeline_mode = #tpu.pipeline_mode<synchronous>, transform_indices = @transform_5, window_bounds = array<i64: 64, 16>}, {pipeline_mode = #tpu.pipeline_mode<synchronous>, transform_indices = @transform_6, window_bounds = array<i64: 1, 16>}, {transform_indices = @transform_7, window_bounds = array<i64: 32, 16>}]} {
    %c0 = arith.constant 0 : index
    %c0_0 = arith.constant 0 : index
    %0 = vector.load %arg1[%c0, %c0_0] : memref<32x441xf32, #tpu.memory_space<vmem>>, vector<32x441xf32>
    %cst = arith.constant dense<0xFF800000> : vector<32xf32>
    %1 = vector.multi_reduction <maximumf>, %0, %cst [1] : vector<32x441xf32> to vector<32xf32>
    %2 = vector.shape_cast %1 : vector<32xf32> to vector<32x1xf32>
    %3 = vector.broadcast %2 : vector<32x1xf32> to vector<32x441xf32>
    %4 = arith.subf %0, %3 : vector<32x441xf32>
    %5 = math.exp %4 : vector<32x441xf32>
    %cst_1 = arith.constant dense<0.000000e+00> : vector<32xf32>
    %6 = vector.multi_reduction <add>, %5, %cst_1 [1] : vector<32x441xf32> to vector<32xf32>
    %7 = vector.shape_cast %6 : vector<32xf32> to vector<32x1xf32>
    %8 = arith.truncf %5 : vector<32x441xf32> to vector<32x441xbf16>
    %9 = tpu.reciprocal %7 {approx = true} : vector<32x1xf32> -> vector<32x1xf32>
    %c0_2 = arith.constant 0 : index
    %c0_3 = arith.constant 0 : index
    %10 = vector.load %arg2[%c0_2, %c0_3] : memref<441x64xbf16, #tpu.memory_space<vmem>>, vector<441x64xbf16>
    %cst_4 = arith.constant dense<0.000000e+00> : vector<32x64xf32>
    %11 = tpu.matmul %8, %10, %cst_4 {dimension_numbers = #tpu.dot_dimension_numbers<[1], [0], [0], [1], [0, 0, 1, 1], [], []>} : vector<32x441xbf16>, vector<441x64xbf16>, vector<32x64xf32> -> vector<32x64xf32>
    %12 = vector.broadcast %9 : vector<32x1xf32> to vector<32x64xf32>
    %13 = arith.mulf %11, %12 : vector<32x64xf32>
    %c0_5 = arith.constant 0 : index
    %c0_6 = arith.constant 0 : index
    %14 = vector.load %arg3[%c0_5, %c0_6] : memref<1x64xf32, #tpu.memory_space<vmem>>, vector<1x64xf32>
    %15 = vector.broadcast %14 : vector<1x64xf32> to vector<32x64xf32>
    %16 = arith.addf %13, %15 : vector<32x64xf32>
    %cst_7 = arith.constant 0.000000e+00 : f32
    %17 = vector.broadcast %cst_7 : f32 to vector<32x64xf32>
    %18 = arith.maximumf %16, %17 : vector<32x64xf32>
    %19 = arith.truncf %18 : vector<32x64xf32> to vector<32x64xbf16>
    %c0_8 = arith.constant 0 : index
    %c0_9 = arith.constant 0 : index
    %20 = vector.load %arg4[%c0_8, %c0_9] : memref<64x64xbf16, #tpu.memory_space<vmem>>, vector<64x64xbf16>
    %cst_10 = arith.constant dense<0.000000e+00> : vector<32x64xf32>
    %21 = tpu.matmul %19, %20, %cst_10 {dimension_numbers = #tpu.dot_dimension_numbers<[1], [0], [0], [1], [0, 0, 1, 1], [], []>} : vector<32x64xbf16>, vector<64x64xbf16>, vector<32x64xf32> -> vector<32x64xf32>
    %c0_11 = arith.constant 0 : index
    %c0_12 = arith.constant 0 : index
    %22 = vector.load %arg5[%c0_11, %c0_12] : memref<1x64xf32, #tpu.memory_space<vmem>>, vector<1x64xf32>
    %23 = vector.broadcast %22 : vector<1x64xf32> to vector<32x64xf32>
    %24 = arith.addf %21, %23 : vector<32x64xf32>
    %cst_13 = arith.constant 0.000000e+00 : f32
    %25 = vector.broadcast %cst_13 : f32 to vector<32x64xf32>
    %26 = arith.maximumf %24, %25 : vector<32x64xf32>
    %27 = arith.truncf %26 : vector<32x64xf32> to vector<32x64xbf16>
    %c0_14 = arith.constant 0 : index
    %c0_15 = arith.constant 0 : index
    %28 = vector.load %arg6[%c0_14, %c0_15] : memref<64x16xbf16, #tpu.memory_space<vmem>>, vector<64x16xbf16>
    %cst_16 = arith.constant dense<0.000000e+00> : vector<32x16xf32>
    %29 = tpu.matmul %27, %28, %cst_16 {dimension_numbers = #tpu.dot_dimension_numbers<[1], [0], [0], [1], [0, 0, 1, 1], [], []>} : vector<32x64xbf16>, vector<64x16xbf16>, vector<32x16xf32> -> vector<32x16xf32>
    %c0_17 = arith.constant 0 : index
    %c0_18 = arith.constant 0 : index
    %30 = vector.load %arg7[%c0_17, %c0_18] : memref<1x16xf32, #tpu.memory_space<vmem>>, vector<1x16xf32>
    %31 = vector.broadcast %30 : vector<1x16xf32> to vector<32x16xf32>
    %32 = arith.addf %29, %31 : vector<32x16xf32>
    %c0_19 = arith.constant 0 : index
    %c0_20 = arith.constant 0 : index
    %33 = vector.load %arg8[%c0_19, %c0_20] : memref<32x16xf32, #tpu.memory_space<vmem>>, vector<32x16xf32>
    tpu.vector_store %arg8[%c0_19, %c0_20], %32 {strides = array<i32>} : memref<32x16xf32, #tpu.memory_space<vmem>>, vector<32x16xf32>,
    return
  }
  func.func @transform_0(%arg0: i32) -> (i32, i32) {
    %c0_i32 = arith.constant 0 : i32
    %c0_i32_0 = arith.constant 0 : i32
    return %arg0, %c0_i32 : i32, i32
  }
  func.func @transform_1(%arg0: i32) -> (i32, i32) {
    %c0_i32 = arith.constant 0 : i32
    %c0_i32_0 = arith.constant 0 : i32
    %c0_i32_1 = arith.constant 0 : i32
    return %c0_i32, %c0_i32_0 : i32, i32
  }
  func.func @transform_2(%arg0: i32) -> (i32, i32) {
    %c0_i32 = arith.constant 0 : i32
    %c0_i32_0 = arith.constant 0 : i32
    %c0_i32_1 = arith.constant 0 : i32
    return %c0_i32, %c0_i32_0 : i32, i32
  }
  func.func @transform_3(%arg0: i32) -> (i32, i32) {
    %c0_i32 = arith.constant 0 : i32
    %c0_i32_0 = arith.constant 0 : i32
    %c0_i32_1 = arith.constant 0 : i32
    return %c0_i32, %c0_i32_0 : i32, i32
  }
  func.func @transform_4(%arg0: i32) -> (i32, i32) {
    %c0_i32 = arith.constant 0 : i32
    %c0_i32_0 = arith.constant 0 : i32
    %c0_i32_1 = arith.constant 0 : i32
    return %c0_i32, %c0_i32_0 : i32, i32
  }
  func.func @transform_5(%arg0: i32) -> (i32, i32) {
    %c0_i32 = arith.constant 0 : i32
    %c0_i32_0 = arith.constant 0 : i32
    %c0_i32_1 = arith.constant 0 : i32
    return %c0_i32, %c0_i32_0 : i32, i32
  }
  func.func @transform_6(%arg0: i32) -> (i32, i32) {
    %c0_i32 = arith.constant 0 : i32
    %c0_i32_0 = arith.constant 0 : i32
    %c0_i32_1 = arith.constant 0 : i32
    return %c0_i32, %c0_i32_0 : i32, i32
  }
  func.func @transform_7(%arg0: i32) -> (i32, i32) {
    %c0_i32 = arith.constant 0 : i32
    %c0_i32_0 = arith.constant 0 : i32
    return %arg0, %c0_i32 : i32, i32
  }
}

</mosaic_0001>

<llo_original>
// kernel: tpu_custom_call.1
$region0: #{tpu_custom_call.1}
  #allocation0 [shape = 'u32[]', space=smem, size = 0x4, offset = 0x4, fixed_abs, tag = 'smem constant byte address 0x4 - core index']
  #allocation1 [shape = 'u32[144,128]{1,0:T(1,128)}', space=vmem, size = 0x12000, scoped, tag = 'internal scratch']
  %s0 = inlined_call_operand.vmem [shape: f32[128,441], index: 0, kind: input, shape index: {}]
  %s1 = inlined_call_operand.vmem [shape: bf16[441,64], index: 1, kind: input, shape index: {}]
  %s2 = inlined_call_operand.vmem [shape: f32[1,64], index: 2, kind: input, shape index: {}]
  %s3 = inlined_call_operand.vmem [shape: bf16[64,64], index: 3, kind: input, shape index: {}]
  %s4 = inlined_call_operand.vmem [shape: f32[1,64], index: 4, kind: input, shape index: {}]
  %s5 = inlined_call_operand.vmem [shape: bf16[64,16], index: 5, kind: input, shape index: {}]
  %s6 = inlined_call_operand.vmem [shape: f32[1,16], index: 6, kind: input, shape index: {}]
  %s7 = inlined_call_operand.vmem [shape: f32[128,16], index: 7, kind: output, shape index: {}]
  %s8 = sld [smem:[#allocation0]]
  $region61: #{tpu_custom_call.1} parent=0
    _
  %s10 = ssub.s32 1, %s8
  %s11 = scalar_select 0, %s10, %s8
  loop: start=0, step=1, limit=6
  $region2: #{tpu_custom_call.1} parent=0 // loop_pre_header
    _
  $region3: #{tpu_custom_call.1} parent=0 // loop_header
    %s13 = sphi 0, %s17
    %p14 = scmp.ge.s32.totalorder %s13, 6
    %s23 = sphi 0, %s25
    %s26 = sphi 0, %s23
    %s27 = sphi 0, %s26
    %s43 = sphi 0, %s27
    %s47 = sphi 0, %s47
    %s49 = sphi 0, %s47
    %s50 = sphi 0, %s49
    %s64 = sphi 0, %s50
    %s68 = sphi 0, %s68
    %s70 = sphi 0, %s68
    %s71 = sphi 0, %s70
    %s85 = sphi 0, %s71
    %s89 = sphi 0, %s89
    %s91 = sphi 0, %s89
    %s92 = sphi 0, %s91
    %s106 = sphi 0, %s92
    %s110 = sphi 0, %s110
    %s112 = sphi 0, %s110
    %s113 = sphi 0, %s112
    %s127 = sphi 0, %s113
    %s131 = sphi 0, %s131
    %s133 = sphi 0, %s131
    %s134 = sphi 0, %s133
    %s148 = sphi 0, %s134
    %s152 = sphi 0, %s152
    %s154 = sphi 0, %s152
    %s155 = sphi 0, %s154
    %s169 = sphi 0, %s155
    %s175 = sphi 0, %s177
    %s178 = sphi 0, %s175
    %s179 = sphi 0, %s178
    %s195 = sphi 0, %s179
  $region4: #{tpu_custom_call.1} parent=0 // loop_header_branch
    %16 = sbr.rel (%p14) target = $region8
  $region5: #{tpu_custom_call.1} parent=0 // loop_body
    %s18 = ssub.s32 %s13, 1
    %s19 = ssub.s32 %s13, 2
    %s20 = sadd.s32 %s13, 1
    %s21 = ssub.s32 %s13, %s20
    %p22 = scmp.eq.s32.totalorder %s21, 0
    %s24 = sadd.s32 %s23, 1
    %s25 = scalar_select %p22, %s23, %s24
    %p28 = pneg %p22
    %p29 = scmp.eq.s32.totalorder %s13, 3
    %p30 = por %p28, %p29
    %p31 = scmp.ne.s32.totalorder %s23, %s26
    %p32 = scmp.eq.s32.totalorder %s13, 0
    %p33 = por %p31, %p32
    %p34 = scmp.ne.s32.totalorder %s23, %s26
    %p35 = scmp.eq.s32.totalorder %s18, 3
    %p36 = por %p34, %p35
    %p37 = scmp.ne.s32.totalorder %s26, %s27
    %p38 = scmp.eq.s32.totalorder %s18, 0
    %p39 = por %p37, %p38
    %p40 = scmp.ne.s32.totalorder %s26, %s27
    %p41 = scmp.eq.s32.totalorder %s19, 3
    %p42 = por %p40, %p41
    %p44 = scmp.ne.s32.totalorder %s27, %s43
    %p45 = scmp.eq.s32.totalorder %s19, 0
    %p46 = por %p44, %p45
    %s48 = sadd.s32 %s47, 1
    %p51 = scmp.eq.s32.totalorder %s13, 3
    %p52 = scmp.ne.s32.totalorder %s47, %s49
    %p53 = scmp.eq.s32.totalorder %s13, 0
    %p54 = por %p52, %p53
    %p55 = scmp.ne.s32.totalorder %s47, %s49
    %p56 = scmp.eq.s32.totalorder %s18, 3
    %p57 = por %p55, %p56
    %p58 = scmp.ne.s32.totalorder %s49, %s50
    %p59 = scmp.eq.s32.totalorder %s18, 0
    %p60 = por %p58, %p59
    %p61 = scmp.ne.s32.totalorder %s49, %s50
    %p62 = scmp.eq.s32.totalorder %s19, 3
    %p63 = por %p61, %p62
    %p65 = scmp.ne.s32.totalorder %s50, %s64
    %p66 = scmp.eq.s32.totalorder %s19, 0
    %p67 = por %p65, %p66
    %s69 = sadd.s32 %s68, 1
    %p72 = scmp.eq.s32.totalorder %s13, 3
    %p73 = scmp.ne.s32.totalorder %s68, %s70
    %p74 = scmp.eq.s32.totalorder %s13, 0
    %p75 = por %p73, %p74
    %p76 = scmp.ne.s32.totalorder %s68, %s70
    %p77 = scmp.eq.s32.totalorder %s18, 3
    %p78 = por %p76, %p77
    %p79 = scmp.ne.s32.totalorder %s70, %s71
    %p80 = scmp.eq.s32.totalorder %s18, 0
    %p81 = por %p79, %p80
    %p82 = scmp.ne.s32.totalorder %s70, %s71
    %p83 = scmp.eq.s32.totalorder %s19, 3
    %p84 = por %p82, %p83
    %p86 = scmp.ne.s32.totalorder %s71, %s85
    %p87 = scmp.eq.s32.totalorder %s19, 0
    %p88 = por %p86, %p87
    %s90 = sadd.s32 %s89, 1
    %p93 = scmp.eq.s32.totalorder %s13, 3
    %p94 = scmp.ne.s32.totalorder %s89, %s91
    %p95 = scmp.eq.s32.totalorder %s13, 0
    %p96 = por %p94, %p95
    %p97 = scmp.ne.s32.totalorder %s89, %s91
    %p98 = scmp.eq.s32.totalorder %s18, 3
    %p99 = por %p97, %p98
    %p100 = scmp.ne.s32.totalorder %s91, %s92
    %p101 = scmp.eq.s32.totalorder %s18, 0
    %p102 = por %p100, %p101
    %p103 = scmp.ne.s32.totalorder %s91, %s92
    %p104 = scmp.eq.s32.totalorder %s19, 3
    %p105 = por %p103, %p104
    %p107 = scmp.ne.s32.totalorder %s92, %s106
    %p108 = scmp.eq.s32.totalorder %s19, 0
    %p109 = por %p107, %p108
    %s111 = sadd.s32 %s110, 1
    %p114 = scmp.eq.s32.totalorder %s13, 3
    %p115 = scmp.ne.s32.totalorder %s110, %s112
    %p116 = scmp.eq.s32.totalorder %s13, 0
    %p117 = por %p115, %p116
    %p118 = scmp.ne.s32.totalorder %s110, %s112
    %p119 = scmp.eq.s32.totalorder %s18, 3
    %p120 = por %p118, %p119
    %p121 = scmp.ne.s32.totalorder %s112, %s113
    %p122 = scmp.eq.s32.totalorder %s18, 0
    %p123 = por %p121, %p122
    %p124 = scmp.ne.s32.totalorder %s112, %s113
    %p125 = scmp.eq.s32.totalorder %s19, 3
    %p126 = por %p124, %p125
    %p128 = scmp.ne.s32.totalorder %s113, %s127
    %p129 = scmp.eq.s32.totalorder %s19, 0
    %p130 = por %p128, %p129
    %s132 = sadd.s32 %s131, 1
    %p135 = scmp.eq.s32.totalorder %s13, 3
    %p136 = scmp.ne.s32.totalorder %s131, %s133
    %p137 = scmp.eq.s32.totalorder %s13, 0
    %p138 = por %p136, %p137
    %p139 = scmp.ne.s32.totalorder %s131, %s133
    %p140 = scmp.eq.s32.totalorder %s18, 3
    %p141 = por %p139, %p140
    %p142 = scmp.ne.s32.totalorder %s133, %s134
    %p143 = scmp.eq.s32.totalorder %s18, 0
    %p144 = por %p142, %p143
    %p145 = scmp.ne.s32.totalorder %s133, %s134
    %p146 = scmp.eq.s32.totalorder %s19, 3
    %p147 = por %p145, %p146
    %p149 = scmp.ne.s32.totalorder %s134, %s148
    %p150 = scmp.eq.s32.totalorder %s19, 0
    %p151 = por %p149, %p150
    %s153 = sadd.s32 %s152, 1
    %p156 = scmp.eq.s32.totalorder %s13, 3
    %p157 = scmp.ne.s32.totalorder %s152, %s154
    %p158 = scmp.eq.s32.totalorder %s13, 0
    %p159 = por %p157, %p158
    %p160 = scmp.ne.s32.totalorder %s152, %s154
    %p161 = scmp.eq.s32.totalorder %s18, 3
    %p162 = por %p160, %p161
    %p163 = scmp.ne.s32.totalorder %s154, %s155
    %p164 = scmp.eq.s32.totalorder %s18, 0
    %p165 = por %p163, %p164
    %p166 = scmp.ne.s32.totalorder %s154, %s155
    %p167 = scmp.eq.s32.totalorder %s19, 3
    %p168 = por %p166, %p167
    %p170 = scmp.ne.s32.totalorder %s155, %s169
    %p171 = scmp.eq.s32.totalorder %s19, 0
    %p172 = por %p170, %p171
    %s173 = ssub.s32 %s13, %s20
    %p174 = scmp.eq.s32.totalorder %s173, 0
    %s176 = sadd.s32 %s175, 1
    %s177 = scalar_select %p174, %s175, %s176
    %p180 = pneg %p174
    %p181 = scmp.eq.s32.totalorder %s13, 3
    %p182 = por %p180, %p181
    %p183 = scmp.ne.s32.totalorder %s175, %s178
    %p184 = scmp.eq.s32.totalorder %s13, 0
    %p185 = por %p183, %p184
    %p186 = scmp.ne.s32.totalorder %s175, %s178
    %p187 = scmp.eq.s32.totalorder %s18, 3
    %p188 = por %p186, %p187
    %p189 = scmp.ne.s32.totalorder %s178, %s179
    %p190 = scmp.eq.s32.totalorder %s18, 0
    %p191 = por %p189, %p190
    %p192 = scmp.ne.s32.totalorder %s178, %s179
    %p193 = scmp.eq.s32.totalorder %s19, 3
    %p194 = por %p192, %p193
    %p196 = scmp.ne.s32.totalorder %s179, %s195
    %p197 = scmp.eq.s32.totalorder %s19, 0
    %p198 = por %p196, %p197
    %p199 = scmp.le.s32.totalorder 1, %s13
    %p200 = scmp.lt.s32.totalorder %s13, 5
    %p201 = pnand %p199, %p200
    %p202 = pneg %p201
    // Predicated region
    $region9: #{tpu_custom_call.1} parent=5 // pred_check
      _
    $region10: #{tpu_custom_call.1} parent=5 // pred_check_branch
      %204 = sbr.rel (%p201) target = $region12
    $region11: #{tpu_custom_call.1} parent=5 // pred_region
      %s205 = ssub.s32 %s13, 1
      // Predicated region
      $region13: #{tpu_custom_call.1} parent=11 // pred_check
        %p206 = pneg %p60
      $region14: #{tpu_custom_call.1} parent=11 // pred_check_branch
        %208 = sbr.rel (%p206) target = $region16
      $region15: #{tpu_custom_call.1} parent=11 // pred_region
        _
      $region16: #{tpu_custom_call.1} parent=11 // pred_fallthru
        _
      // Predicated region
      $region17: #{tpu_custom_call.1} parent=11 // pred_check
        %p209 = pneg %p81
      $region18: #{tpu_custom_call.1} parent=11 // pred_check_branch
        %211 = sbr.rel (%p209) target = $region20
      $region19: #{tpu_custom_call.1} parent=11 // pred_region
        _
      $region20: #{tpu_custom_call.1} parent=11 // pred_fallthru
        _
      // Predicated region
      $region21: #{tpu_custom_call.1} parent=11 // pred_check
        %p212 = pneg %p102
      $region22: #{tpu_custom_call.1} parent=11 // pred_check_branch
        %214 = sbr.rel (%p212) target = $region24
      $region23: #{tpu_custom_call.1} parent=11 // pred_region
        _
      $region24: #{tpu_custom_call.1} parent=11 // pred_fallthru
        _
      // Predicated region
      $region25: #{tpu_custom_call.1} parent=11 // pred_check
        %p215 = pneg %p123
      $region26: #{tpu_custom_call.1} parent=11 // pred_check_branch
        %217 = sbr.rel (%p215) target = $region28
      $region27: #{tpu_custom_call.1} parent=11 // pred_region
        _
      $region28: #{tpu_custom_call.1} parent=11 // pred_fallthru
        _
      // Predicated region
      $region29: #{tpu_custom_call.1} parent=11 // pred_check
        %p218 = pneg %p144
      $region30: #{tpu_custom_call.1} parent=11 // pred_check_branch
        %220 = sbr.rel (%p218) target = $region32
      $region31: #{tpu_custom_call.1} parent=11 // pred_region
        _
      $region32: #{tpu_custom_call.1} parent=11 // pred_fallthru
        _
      // Predicated region
      $region33: #{tpu_custom_call.1} parent=11 // pred_check
        %p221 = pneg %p165
      $region34: #{tpu_custom_call.1} parent=11 // pred_check_branch
        %223 = sbr.rel (%p221) target = $region36
      $region35: #{tpu_custom_call.1} parent=11 // pred_region
        _
      $region36: #{tpu_custom_call.1} parent=11 // pred_fallthru
        _
    $region12: #{tpu_custom_call.1} parent=5 // pred_fallthru
      _
    %p224 = scmp.lt.s32.totalorder %s13, 4
    // Predicated region
    $region37: #{tpu_custom_call.1} parent=5 // pred_check
      %p225 = pneg %p224
    $region38: #{tpu_custom_call.1} parent=5 // pred_check_branch
      %227 = sbr.rel (%p225) target = $region40
    $region39: #{tpu_custom_call.1} parent=5 // pred_region
      // Predicated region
      $region41: #{tpu_custom_call.1} parent=39 // pred_check
        %p228 = pneg %p33
      $region42: #{tpu_custom_call.1} parent=39 // pred_check_branch
        %230 = sbr.rel (%p228) target = $region44
      $region43: #{tpu_custom_call.1} parent=39 // pred_region
        %s231 = smul.u32 4, %s13
        %p232 = scmp.lt.s32.totalorder %s231, 15
        %s233 = scalar_select %p232, %s231, 15
        %s234 = smul.addr %s233, 4
        %s235 = smul.addr %s234, 8
        %s236 = scalar_lea.vmem %s0, %s235
        %s237 = smul.u32 4, %s13
      $region44: #{tpu_custom_call.1} parent=39 // pred_fallthru
        _
    $region40: #{tpu_custom_call.1} parent=5 // pred_fallthru
      _
    %p238 = scmp.le.s32.totalorder 1, %s13
    %p239 = scmp.lt.s32.totalorder %s13, 5
    %p240 = pnand %p238, %p239
    %p241 = pneg %p240
    // Predicated region
    $region45: #{tpu_custom_call.1} parent=5 // pred_check
      _
    $region46: #{tpu_custom_call.1} parent=5 // pred_check_branch
      %243 = sbr.rel (%p240) target = $region48
    $region47: #{tpu_custom_call.1} parent=5 // pred_region
      %s244 = ssub.s32 %s13, 1
      %s245 = smul.u32 4, %s18
      %p246 = scmp.lt.s32.totalorder %s245, 15
      %s247 = scalar_select %p246, %s245, 15
      %s248 = smul.addr %s247, 4
      %s249 = smul.addr %s248, 8
      %s250 = scalar_lea.vmem %s0, %s249
      %p251 = pneg %p39
      %p252 = pneg %p36
      %p253 = pneg %p60
      %p254 = pneg %p57
      %p255 = pneg %p81
      %p256 = pneg %p78
      %p257 = pneg %p102
      %p258 = pneg %p99
      %p259 = pneg %p123
      %p260 = pneg %p120
      %p261 = pneg %p144
      %p262 = pneg %p141
      %p263 = pneg %p165
      %p264 = pneg %p162
      %p265 = pneg %p191
      %p266 = pneg %p188
      %s267 = smul.u32 4, %s18
      %p268 = scmp.lt.s32.totalorder %s267, 15
      %s269 = scalar_select %p268, %s267, 15
      %s270 = smul.addr %s269, 8
      %s271 = scalar_lea.vmem %s7, %s270
      %s272 = smul.u32 4, %s18
      %p273 = scmp.lt.s32.totalorder %s272, 15
      %s274 = scalar_select %p273, %s272, 15
      %s275 = smul.addr %s274, 4
      %s276 = smul.addr %s275, 8
      %s277 = scalar_lea.vmem %s0, %s276
      %s278 = smul.u32 4, %s18
      %s279 = smul.u32 4, %s18
      %p280 = scmp.lt.s32.totalorder %s279, 15
      %s281 = scalar_select %p280, %s279, 15
      %s282 = smul.addr %s281, 8
      %s283 = scalar_lea.vmem %s7, %s282
      %s284 = smul.u32 4, %s18
      %v286 = vld [vmem:[%s277] sm:$0xff]
      %v287 = vld [vmem:[%s277 + $0x8] sm:$0xff]
      %v288 = vld [vmem:[%s277 + $0x10] sm:$0xff]
      %v289 = vld [vmem:[%s277 + $0x18] sm:$0xff]
      %v290 = vld [vmem:[%s277 + $0x20] sm:$0xff]
      %v291 = vld [vmem:[%s277 + $0x28] sm:$0xff]
      %v292 = vld [vmem:[%s277 + $0x30] sm:$0xff]
      %v293 = vld [vmem:[%s277 + $0x38] sm:$0xff]
      %v294 = vld [vmem:[%s277 + $0x40] sm:$0xff]
      %v295 = vld [vmem:[%s277 + $0x48] sm:$0xff]
      %v296 = vld [vmem:[%s277 + $0x50] sm:$0xff]
      %v297 = vld [vmem:[%s277 + $0x58] sm:$0xff]
      %v298 = vld [vmem:[%s277 + $0x60] sm:$0xff]
      %v299 = vld [vmem:[%s277 + $0x68] sm:$0xff]
      %v300 = vld [vmem:[%s277 + $0x70] sm:$0xff]
      %v301 = vld [vmem:[%s277 + $0x78] sm:$0xff]
      %v302 = vmax.f32 %v286, %v287
      %v303 = vmax.f32 %v302, %v288
      %vm304 = vcmask 465920
      %v305 = vsel %vm304, %v289, -inf
      %v306 = vmax.f32 %v303, %v305
      %307 = vmax.xlane.f32.xlu0 %v306
      %v308 = vpop.xlane.xlu0 %307
      %v309 = vmax.f32 %v290, %v291
      %v310 = vmax.f32 %v309, %v292
      %v311 = vsel %vm304, %v293, -inf
      %v312 = vmax.f32 %v310, %v311
      %313 = vmax.xlane.f32.xlu0 %v312
      %v314 = vpop.xlane.xlu0 %313
      %v315 = vmax.f32 %v294, %v295
      %v316 = vmax.f32 %v315, %v296
      %v317 = vsel %vm304, %v297, -inf
      %v318 = vmax.f32 %v316, %v317
      %319 = vmax.xlane.f32.xlu0 %v318
      %v320 = vpop.xlane.xlu0 %319
      %v321 = vmax.f32 %v298, %v299
      %v322 = vmax.f32 %v321, %v300
      %v323 = vsel %vm304, %v301, -inf
      %v324 = vmax.f32 %v322, %v323
      %325 = vmax.xlane.f32.xlu0 %v324
      %v326 = vpop.xlane.xlu0 %325
      %v327 = vsub.f32 %v286, %v308
      %v328 = vsub.f32 %v287, %v308
      %v329 = vsub.f32 %v288, %v308
      %v330 = vsub.f32 %v289, %v308
      %v331 = vsub.f32 %v290, %v314
      %v332 = vsub.f32 %v291, %v314
      %v333 = vsub.f32 %v292, %v314
      %v334 = vsub.f32 %v293, %v314
      %v335 = vsub.f32 %v294, %v320
      %v336 = vsub.f32 %v295, %v320
      %v337 = vsub.f32 %v296, %v320
      %v338 = vsub.f32 %v297, %v320
      %v339 = vsub.f32 %v298, %v326
      %v340 = vsub.f32 %v299, %v326
      %v341 = vsub.f32 %v300, %v326
      %v342 = vsub.f32 %v301, %v326
      %v343 = vmul.f32 %v327, 1.442695
      %v344 = vpow.pop %v343
      %v345 = vmul.f32 %v328, 1.442695
      %v346 = vpow.pop %v345
      %v347 = vmul.f32 %v329, 1.442695
      %v348 = vpow.pop %v347
      %v349 = vmul.f32 %v330, 1.442695
      %v350 = vpow.pop %v349
      %v351 = vmul.f32 %v331, 1.442695
      %v352 = vpow.pop %v351
      %v353 = vmul.f32 %v332, 1.442695
      %v354 = vpow.pop %v353
      %v355 = vmul.f32 %v333, 1.442695
      %v356 = vpow.pop %v355
      %v357 = vmul.f32 %v334, 1.442695
      %v358 = vpow.pop %v357
      %v359 = vmul.f32 %v335, 1.442695
      %v360 = vpow.pop %v359
      %v361 = vmul.f32 %v336, 1.442695
      %v362 = vpow.pop %v361
      %v363 = vmul.f32 %v337, 1.442695
      %v364 = vpow.pop %v363
      %v365 = vmul.f32 %v338, 1.442695
      %v366 = vpow.pop %v365
      %v367 = vmul.f32 %v339, 1.442695
      %v368 = vpow.pop %v367
      %v369 = vmul.f32 %v340, 1.442695
      %v370 = vpow.pop %v369
      %v371 = vmul.f32 %v341, 1.442695
      %v372 = vpow.pop %v371
      %v373 = vmul.f32 %v342, 1.442695
      %v374 = vpow.pop %v373
      %v375 = vadd.f32 %v344, %v346
      %v376 = vadd.f32 %v375, %v348
      %v377 = vsel %vm304, %v350, 0.0
      %v378 = vadd.f32 %v376, %v377
      %379 = vadd.xlane.f32.xlu0 %v378
      %v380 = vpop.xlane.xlu0 %379
      %v381 = vadd.f32 %v352, %v354
      %v382 = vadd.f32 %v381, %v356
      %v383 = vsel %vm304, %v358, 0.0
      %v384 = vadd.f32 %v382, %v383
      %385 = vadd.xlane.f32.xlu0 %v384
      %v386 = vpop.xlane.xlu0 %385
      %v387 = vadd.f32 %v360, %v362
      %v388 = vadd.f32 %v387, %v364
      %v389 = vsel %vm304, %v366, 0.0
      %v390 = vadd.f32 %v388, %v389
      %391 = vadd.xlane.f32.xlu0 %v390
      %v392 = vpop.xlane.xlu0 %391
      %v393 = vadd.f32 %v368, %v370
      %v394 = vadd.f32 %v393, %v372
      %v395 = vsel %vm304, %v374, 0.0
      %v396 = vadd.f32 %v394, %v395
      %397 = vadd.xlane.f32.xlu0 %v396
      %v398 = vpop.xlane.xlu0 %397
      %v399 = vpack.c.bf16 %v352, %v344
      %v400 = vpack.c.bf16 %v354, %v346
      %v401 = vpack.c.bf16 %v356, %v348
      %v402 = vpack.c.bf16 %v358, %v350
      %v403 = vpack.c.bf16 %v368, %v360
      %v404 = vpack.c.bf16 %v370, %v362
      %v405 = vpack.c.bf16 %v372, %v364
      %v406 = vpack.c.bf16 %v374, %v366
      %v407 = vrcp.pop %v380
      %v408 = vrcp.pop %v386
      %v409 = vrcp.pop %v392
      %v410 = vrcp.pop %v398
      %v411 = vld [vmem:[%s1] sm:$0xf]
      %v412 = vld [vmem:[%s1 + $0x4] sm:$0xf]
      %v413 = vld [vmem:[%s1 + $0x8] sm:$0xf]
      %v414 = vld [vmem:[%s1 + $0xc] sm:$0xf]
      %v415 = vld [vmem:[%s1 + $0x10] sm:$0xf]
      %v416 = vld [vmem:[%s1 + $0x14] sm:$0xf]
      %v417 = vld [vmem:[%s1 + $0x18] sm:$0xf]
      %v418 = vld [vmem:[%s1 + $0x1c] sm:$0xf]
      %v419 = vld [vmem:[%s1 + $0x20] sm:$0xf]
      %v420 = vld [vmem:[%s1 + $0x24] sm:$0xf]
      %v421 = vld [vmem:[%s1 + $0x28] sm:$0xf]
      %v422 = vld [vmem:[%s1 + $0x2c] sm:$0xf]
      %v423 = vld [vmem:[%s1 + $0x30] sm:$0xf]
      %v424 = vld [vmem:[%s1 + $0x34] sm:$0xf]
      %v425 = vld [vmem:[%s1 + $0x38] sm:$0xf]
      %v426 = vld [vmem:[%s1 + $0x3c] sm:$0xf]
      %v427 = vld [vmem:[%s1 + $0x40] sm:$0xf]
      %v428 = vld [vmem:[%s1 + $0x44] sm:$0xf]
      %v429 = vld [vmem:[%s1 + $0x48] sm:$0xf]
      %v430 = vld [vmem:[%s1 + $0x4c] sm:$0xf]
      %v431 = vld [vmem:[%s1 + $0x50] sm:$0xf]
      %v432 = vld [vmem:[%s1 + $0x54] sm:$0xf]
      %v433 = vld [vmem:[%s1 + $0x58] sm:$0xf]
      %v434 = vld [vmem:[%s1 + $0x5c] sm:$0xf]
      %v435 = vld [vmem:[%s1 + $0x60] sm:$0xf]
      %v436 = vld [vmem:[%s1 + $0x64] sm:$0xf]
      %v437 = vld [vmem:[%s1 + $0x68] sm:$0xf]
      %v438 = vld [vmem:[%s1 + $0x6c] sm:$0xf]
      %v439 = vld [vmem:[%s1 + $0x70] sm:$0xf]
      %v440 = vld [vmem:[%s1 + $0x74] sm:$0xf]
      %v441 = vld [vmem:[%s1 + $0x78] sm:$0xf]
      %v442 = vld [vmem:[%s1 + $0x7c] sm:$0xf]
      %v443 = vld [vmem:[%s1 + $0x80] sm:$0xf]
      %v444 = vld [vmem:[%s1 + $0x84] sm:$0xf]
      %v445 = vld [vmem:[%s1 + $0x88] sm:$0xf]
      %v446 = vld [vmem:[%s1 + $0x8c] sm:$0xf]
      %v447 = vld [vmem:[%s1 + $0x90] sm:$0xf]
      %v448 = vld [vmem:[%s1 + $0x94] sm:$0xf]
      %v449 = vld [vmem:[%s1 + $0x98] sm:$0xf]
      %v450 = vld [vmem:[%s1 + $0x9c] sm:$0xf]
      %v451 = vld [vmem:[%s1 + $0xa0] sm:$0xf]
      %v452 = vld [vmem:[%s1 + $0xa4] sm:$0xf]
      %v453 = vld [vmem:[%s1 + $0xa8] sm:$0xf]
      %v454 = vld [vmem:[%s1 + $0xac] sm:$0xf]
      %v455 = vld [vmem:[%s1 + $0xb0] sm:$0xf]
      %v456 = vld [vmem:[%s1 + $0xb4] sm:$0xf]
      %v457 = vld [vmem:[%s1 + $0xb8] sm:$0xf]
      %v458 = vld [vmem:[%s1 + $0xbc] sm:$0xf]
      %v459 = vld [vmem:[%s1 + $0xc0] sm:$0xf]
      %v460 = vld [vmem:[%s1 + $0xc4] sm:$0xf]
      %v461 = vld [vmem:[%s1 + $0xc8] sm:$0xf]
      %v462 = vld [vmem:[%s1 + $0xcc] sm:$0xf]
      %v463 = vld [vmem:[%s1 + $0xd0] sm:$0xf]
      %v464 = vld [vmem:[%s1 + $0xd4] sm:$0xf]
      %v465 = vld [vmem:[%s1 + $0xd8] sm:$0xf]
      %v466 = vld [vmem:[%s1 + $0xdc] sm:$0x1]
      %v523 = vunpack.c.l.b16 %v411
      %v524 = vunpack.c.l.b16 %v412
      %v525 = vunpack.c.l.b16 %v413
      %v526 = vunpack.c.l.b16 %v414
      %v527 = vunpack.c.l.b16 %v415
      %v528 = vunpack.c.l.b16 %v416
      %v529 = vunpack.c.l.b16 %v417
      %v530 = vunpack.c.l.b16 %v418
      %v531 = vunpack.c.l.b16 %v419
      %v532 = vunpack.c.l.b16 %v420
      %v533 = vunpack.c.l.b16 %v421
      %v534 = vunpack.c.l.b16 %v422
      %v535 = vunpack.c.l.b16 %v423
      %v536 = vunpack.c.l.b16 %v424
      %v537 = vunpack.c.l.b16 %v425
      %v538 = vunpack.c.l.b16 %v426
      %v539 = vunpack.c.l.b16 %v427
      %v540 = vunpack.c.l.b16 %v428
      %v541 = vunpack.c.l.b16 %v429
      %v542 = vunpack.c.l.b16 %v430
      %v543 = vunpack.c.l.b16 %v431
      %v544 = vunpack.c.l.b16 %v432
      %v545 = vunpack.c.l.b16 %v433
      %v546 = vunpack.c.l.b16 %v434
      %v547 = vunpack.c.l.b16 %v435
      %v548 = vunpack.c.l.b16 %v436
      %v549 = vunpack.c.l.b16 %v437
      %v550 = vunpack.c.l.b16 %v438
      %v551 = vunpack.c.l.b16 %v439
      %v552 = vunpack.c.l.b16 %v440
      %v553 = vunpack.c.l.b16 %v441
      %v554 = vunpack.c.l.b16 %v442
      %v555 = vunpack.c.l.b16 %v443
      %v556 = vunpack.c.l.b16 %v444
      %v557 = vunpack.c.l.b16 %v445
      %v558 = vunpack.c.l.b16 %v446
      %v559 = vunpack.c.l.b16 %v447
      %v560 = vunpack.c.l.b16 %v448
      %v561 = vunpack.c.l.b16 %v449
      %v562 = vunpack.c.l.b16 %v450
      %v563 = vunpack.c.l.b16 %v451
      %v564 = vunpack.c.l.b16 %v452
      %v565 = vunpack.c.l.b16 %v453
      %v566 = vunpack.c.l.b16 %v454
      %v567 = vunpack.c.l.b16 %v455
      %v568 = vunpack.c.l.b16 %v456
      %v569 = vunpack.c.l.b16 %v457
      %v570 = vunpack.c.l.b16 %v458
      %v571 = vunpack.c.l.b16 %v459
      %v572 = vunpack.c.l.b16 %v460
      %v573 = vunpack.c.l.b16 %v461
      %v574 = vunpack.c.l.b16 %v462
      %v575 = vunpack.c.l.b16 %v463
      %v576 = vunpack.c.l.b16 %v464
      %v577 = vunpack.c.l.b16 %v465
      %v578 = vunpack.c.l.b16 %v466
      %v579 = vpack.c.b16 %v524, %v523
      %v580 = vpack.c.b16 %v526, %v525
      %v581 = vpack.c.b16 %v528, %v527
      %v582 = vpack.c.b16 %v530, %v529
      %v583 = vpack.c.b16 %v532, %v531
      %v584 = vpack.c.b16 %v534, %v533
      %v585 = vpack.c.b16 %v536, %v535
      %v586 = vpack.c.b16 %v538, %v537
      %v587 = vpack.c.b16 %v540, %v539
      %v588 = vpack.c.b16 %v542, %v541
      %v589 = vpack.c.b16 %v544, %v543
      %v590 = vpack.c.b16 %v546, %v545
      %v591 = vpack.c.b16 %v548, %v547
      %v592 = vpack.c.b16 %v550, %v549
      %v593 = vpack.c.b16 %v552, %v551
      %v594 = vpack.c.b16 %v554, %v553
      %v595 = vpack.c.b16 %v556, %v555
      %v596 = vpack.c.b16 %v558, %v557
      %v597 = vpack.c.b16 %v560, %v559
      %v598 = vpack.c.b16 %v562, %v561
      %v599 = vpack.c.b16 %v564, %v563
      %v600 = vpack.c.b16 %v566, %v565
      %v601 = vpack.c.b16 %v568, %v567
      %v602 = vpack.c.b16 %v570, %v569
      %v603 = vpack.c.b16 %v572, %v571
      %v604 = vpack.c.b16 %v574, %v573
      %v605 = vpack.c.b16 %v576, %v575
      %v606 = vpack.c.b16 %v578, %v577
      %v635 = vsel %vm304, %v402, 0
      %v638 = vsel %vm304, %v406, 0
      %vm640 = vcmask 1043456
      %vm641 = vcmask 1044480
      %v642 = vsel %vm640, 4294967295, 65535
      %v643 = vsel %vm641, %v642, 0
      %v645 = vand.u32 %v606, %v643
      %647 = vmatprep.subr.bf16.mxu0 0
      %648 = vmatpush1.bf16.msra.mxu0 %v586
      %649 = vmatprep.subr.bf16.mxu0 0
      %650 = vmatpush1.bf16.msra.mxu0 %v585
      %651 = vmatprep.subr.bf16.mxu0 0
      %652 = vmatpush1.bf16.msra.mxu0 %v584
      %653 = vmatprep.subr.bf16.mxu0 0
      %654 = vmatpush1.bf16.msra.mxu0 %v583
      %655 = vmatprep.subr.bf16.mxu0 0
      %656 = vmatpush1.bf16.msra.mxu0 %v582
      %657 = vmatprep.subr.bf16.mxu0 0
      %658 = vmatpush1.bf16.msra.mxu0 %v581
      %659 = vmatprep.subr.bf16.mxu0 0
      %660 = vmatpush1.bf16.msra.mxu0 %v580
      %661 = vmatprep.subr.bf16.mxu0 0
      %662 = vmatpush1.bf16.msra.mxu0 %v579
      %663 = vmatprep.subr.bf16.mxu0 0
      %664 = vmatpush2.bf16.msra.mxu0 %v594
      %665 = vmatprep.subr.bf16.mxu0 0
      %666 = vmatpush2.bf16.msra.mxu0 %v593
      %667 = vmatprep.subr.bf16.mxu0 0
      %668 = vmatpush2.bf16.msra.mxu0 %v592
      %669 = vmatprep.subr.bf16.mxu0 0
      %670 = vmatpush2.bf16.msra.mxu0 %v591
      %671 = vmatprep.subr.bf16.mxu0 0
      %672 = vmatpush2.bf16.msra.mxu0 %v590
      %673 = vmatprep.subr.bf16.mxu0 0
      %674 = vmatpush2.bf16.msra.mxu0 %v589
      %675 = vmatprep.subr.bf16.mxu0 0
      %676 = vmatpush2.bf16.msra.mxu0 %v588
      %677 = vmatprep.subr.bf16.mxu0 0
      %678 = vmatpush2.bf16.msra.mxu0 %v587
      %679 = vmatprep.mubr.bf16.mxu0 %v400
      %680 = vmatmul.mubr.bf16.gmra.mxu0 %v399
      %v681 = vpop.f32.mrf.mxu0
      %v682 = vadd.f32 0.0, %v681
      %v683 = vpop.f32.mrf.mxu0
      %v684 = vpop.f32.mrf.mxu0
      %v685 = vadd.f32 0.0, %v684
      %v686 = vpop.f32.mrf.mxu0
      %687 = vmatprep.mubr.bf16.mxu0 %v404
      %688 = vmatmul.mubr.bf16.gmra.mxu0 %v403
      %v689 = vpop.f32.mrf.mxu0
      %v690 = vadd.f32 0.0, %v689
      %v691 = vpop.f32.mrf.mxu0
      %v692 = vpop.f32.mrf.mxu0
      %v693 = vadd.f32 0.0, %v692
      %v694 = vpop.f32.mrf.mxu0
      %695 = vdwg.mxu0
      %696 = vmatprep.subr.bf16.mxu0 0
      %697 = vmatpush1.bf16.msra.mxu0 %v602
      %698 = vmatprep.subr.bf16.mxu0 0
      %699 = vmatpush1.bf16.msra.mxu0 %v601
      %700 = vmatprep.subr.bf16.mxu0 0
      %701 = vmatpush1.bf16.msra.mxu0 %v600
      %702 = vmatprep.subr.bf16.mxu0 0
      %703 = vmatpush1.bf16.msra.mxu0 %v599
      %704 = vmatprep.subr.bf16.mxu0 0
      %705 = vmatpush1.bf16.msra.mxu0 %v598
      %706 = vmatprep.subr.bf16.mxu0 0
      %707 = vmatpush1.bf16.msra.mxu0 %v597
      %708 = vmatprep.subr.bf16.mxu0 0
      %709 = vmatpush1.bf16.msra.mxu0 %v596
      %710 = vmatprep.subr.bf16.mxu0 0
      %711 = vmatpush1.bf16.msra.mxu0 %v595
      %712 = vmatprep.subr.bf16.mxu0 0
      %713 = vmatpush2.bf16.msra.mxu0 0
      %714 = vmatprep.subr.bf16.mxu0 0
      %715 = vmatpush2.bf16.msra.mxu0 0
      %716 = vmatprep.subr.bf16.mxu0 0
      %717 = vmatpush2.bf16.msra.mxu0 0
      %718 = vmatprep.subr.bf16.mxu0 0
      %719 = vmatpush2.bf16.msra.mxu0 0
      %720 = vmatprep.subr.bf16.mxu0 0
      %721 = vmatpush2.bf16.msra.mxu0 %v645
      %722 = vmatprep.subr.bf16.mxu0 0
      %723 = vmatpush2.bf16.msra.mxu0 %v605
      %724 = vmatprep.subr.bf16.mxu0 0
      %725 = vmatpush2.bf16.msra.mxu0 %v604
      %726 = vmatprep.subr.bf16.mxu0 0
      %727 = vmatpush2.bf16.msra.mxu0 %v603
      %728 = vmatprep.mubr.bf16.mxu0 %v635
      %729 = vmatmul.mubr.bf16.gmra.mxu0 %v401
      %v730 = vpop.f32.mrf.mxu0
      %v731 = vadd.f32 %v682, %v730
      %v732 = vpop.f32.mrf.mxu0
      %v733 = vpop.f32.mrf.mxu0
      %v734 = vadd.f32 %v685, %v733
      %v735 = vpop.f32.mrf.mxu0
      %736 = vmatprep.mubr.bf16.mxu0 %v638
      %737 = vmatmul.mubr.bf16.gmra.mxu0 %v405
      %v738 = vpop.f32.mrf.mxu0
      %v739 = vadd.f32 %v690, %v738
      %v740 = vpop.f32.mrf.mxu0
      %v741 = vpop.f32.mrf.mxu0
      %v742 = vadd.f32 %v693, %v741
      %v743 = vpop.f32.mrf.mxu0
      %744 = vdwg.mxu0
      %v745 = vmul.f32 %v731, %v407
      %v746 = vmul.f32 %v734, %v408
      %v747 = vmul.f32 %v739, %v409
      %v748 = vmul.f32 %v742, %v410
      %v749 = vld [vmem:[%s2] sm:$0x1]
      %v751 = vlaneseq
      %v752 = vshrl.u32 %v751, 7
      %v753 = vsub.s32 0, %v752
      %v754 = vrot.slane %v749, %v753
      %v756 = vadd.f32 %v745, %v754
      %v757 = vadd.f32 %v746, %v754
      %v758 = vadd.f32 %v747, %v754
      %v759 = vadd.f32 %v748, %v754
      %v760 = vmax.f32 %v756, 0.0
      %v761 = vmax.f32 %v757, 0.0
      %v762 = vmax.f32 %v758, 0.0
      %v763 = vmax.f32 %v759, 0.0
      %v764 = vpack.c.bf16 %v761, %v760
      %v765 = vpack.c.bf16 %v763, %v762
      %v766 = vld [vmem:[%s3] sm:$0xf]
      %v767 = vld [vmem:[%s3 + $0x4] sm:$0xf]
      %v768 = vld [vmem:[%s3 + $0x8] sm:$0xf]
      %v769 = vld [vmem:[%s3 + $0xc] sm:$0xf]
      %v770 = vld [vmem:[%s3 + $0x10] sm:$0xf]
      %v771 = vld [vmem:[%s3 + $0x14] sm:$0xf]
      %v772 = vld [vmem:[%s3 + $0x18] sm:$0xf]
      %v773 = vld [vmem:[%s3 + $0x1c] sm:$0xf]
      %v774 = vld [vmem:[%s4] sm:$0x1]
      %v776 = vlaneseq
      %v777 = vshrl.u32 %v776, 7
      %v778 = vsub.s32 0, %v777
      %v779 = vrot.slane %v774, %v778
      %v789 = vunpack.c.l.b16 %v766
      %v790 = vunpack.c.l.b16 %v767
      %v791 = vunpack.c.l.b16 %v768
      %v792 = vunpack.c.l.b16 %v769
      %v793 = vunpack.c.l.b16 %v770
      %v794 = vunpack.c.l.b16 %v771
      %v795 = vunpack.c.l.b16 %v772
      %v796 = vunpack.c.l.b16 %v773
      %v797 = vpack.c.b16 %v790, %v789
      %v798 = vpack.c.b16 %v792, %v791
      %v799 = vpack.c.b16 %v794, %v793
      %v800 = vpack.c.b16 %v796, %v795
      %vm805 = vcmask 523264
      %v807 = vsel %vm805, %v764, 0
      %v810 = vsel %vm805, %v765, 0
      %812 = vmatprep.subr.bf16.mxu0 0
      %813 = vmatpush1.bf16.msra.mxu0 0
      %814 = vmatprep.subr.bf16.mxu0 0
      %815 = vmatpush1.bf16.msra.mxu0 0
      %816 = vmatprep.subr.bf16.mxu0 0
      %817 = vmatpush1.bf16.msra.mxu0 0
      %818 = vmatprep.subr.bf16.mxu0 0
      %819 = vmatpush1.bf16.msra.mxu0 0
      %820 = vmatprep.subr.bf16.mxu0 0
      %821 = vmatpush1.bf16.msra.mxu0 %v800
      %822 = vmatprep.subr.bf16.mxu0 0
      %823 = vmatpush1.bf16.msra.mxu0 %v799
      %824 = vmatprep.subr.bf16.mxu0 0
      %825 = vmatpush1.bf16.msra.mxu0 %v798
      %826 = vmatprep.subr.bf16.mxu0 0
      %827 = vmatpush1.bf16.msra.mxu0 %v797
      %828 = vmatprep.subr.bf16.mxu0 0
      %829 = vmatpush2.bf16.msra.mxu0 0
      %830 = vmatprep.subr.bf16.mxu0 0
      %831 = vmatpush2.bf16.msra.mxu0 0
      %832 = vmatprep.subr.bf16.mxu0 0
      %833 = vmatpush2.bf16.msra.mxu0 0
      %834 = vmatprep.subr.bf16.mxu0 0
      %835 = vmatpush2.bf16.msra.mxu0 0
      %836 = vmatprep.subr.bf16.mxu0 0
      %837 = vmatpush2.bf16.msra.mxu0 0
      %838 = vmatprep.subr.bf16.mxu0 0
      %839 = vmatpush2.bf16.msra.mxu0 0
      %840 = vmatprep.subr.bf16.mxu0 0
      %841 = vmatpush2.bf16.msra.mxu0 0
      %842 = vmatprep.subr.bf16.mxu0 0
      %843 = vmatpush2.bf16.msra.mxu0 0
      %844 = vmatprep.mubr.bf16.mxu0 0
      %845 = vmatmul.mubr.bf16.gmra.mxu0 %v807
      %v846 = vpop.f32.mrf.mxu0
      %v847 = vadd.f32 %v779, %v846
      %v848 = vpop.f32.mrf.mxu0
      %v849 = vpop.f32.mrf.mxu0
      %v850 = vadd.f32 %v779, %v849
      %v851 = vpop.f32.mrf.mxu0
      %852 = vmatprep.mubr.bf16.mxu0 0
      %853 = vmatmul.mubr.bf16.gmra.mxu0 %v810
      %v854 = vpop.f32.mrf.mxu0
      %v855 = vadd.f32 %v779, %v854
      %v856 = vpop.f32.mrf.mxu0
      %v857 = vpop.f32.mrf.mxu0
      %v858 = vadd.f32 %v779, %v857
      %v859 = vpop.f32.mrf.mxu0
      %860 = vdwg.mxu0
      %v861 = vmax.f32 %v847, 0.0
      %v862 = vmax.f32 %v850, 0.0
      %v863 = vmax.f32 %v855, 0.0
      %v864 = vmax.f32 %v858, 0.0
      %v865 = vpack.c.bf16 %v862, %v861
      %v866 = vpack.c.bf16 %v864, %v863
      %v867 = vld [vmem:[%s5] sm:$0xf]
      %v868 = vld [vmem:[%s5 + $0x4] sm:$0xf]
      %v869 = vld [vmem:[%s5 + $0x8] sm:$0xf]
      %v870 = vld [vmem:[%s5 + $0xc] sm:$0xf]
      %v871 = vld [vmem:[%s5 + $0x10] sm:$0xf]
      %v872 = vld [vmem:[%s5 + $0x14] sm:$0xf]
      %v873 = vld [vmem:[%s5 + $0x18] sm:$0xf]
      %v874 = vld [vmem:[%s5 + $0x1c] sm:$0xf]
      %v875 = vld [vmem:[%s6] sm:$0x1]
      %v877 = vlaneseq
      %v878 = vshrl.u32 %v877, 7
      %v879 = vsub.s32 0, %v878
      %v880 = vrot.slane %v875, %v879
      %v890 = vunpack.c.l.b16 %v867
      %v891 = vunpack.c.l.b16 %v868
      %v892 = vunpack.c.l.b16 %v869
      %v893 = vunpack.c.l.b16 %v870
      %v894 = vunpack.c.l.b16 %v871
      %v895 = vunpack.c.l.b16 %v872
      %v896 = vunpack.c.l.b16 %v873
      %v897 = vunpack.c.l.b16 %v874
      %v898 = vpack.c.b16 %v891, %v890
      %v899 = vpack.c.b16 %v893, %v892
      %v900 = vpack.c.b16 %v895, %v894
      %v901 = vpack.c.b16 %v897, %v896
      %v907 = vsel %vm805, %v865, 0
      %v910 = vsel %vm805, %v866, 0
      %912 = vmatprep.subr.bf16.mxu0 0
      %913 = vmatpush1.bf16.msra.mxu0 0
      %914 = vmatprep.subr.bf16.mxu0 0
      %915 = vmatpush1.bf16.msra.mxu0 0
      %916 = vmatprep.subr.bf16.mxu0 0
      %917 = vmatpush1.bf16.msra.mxu0 0
      %918 = vmatprep.subr.bf16.mxu0 0
      %919 = vmatpush1.bf16.msra.mxu0 0
      %920 = vmatprep.subr.bf16.mxu0 0
      %921 = vmatpush1.bf16.msra.mxu0 %v901
      %922 = vmatprep.subr.bf16.mxu0 0
      %923 = vmatpush1.bf16.msra.mxu0 %v900
      %924 = vmatprep.subr.bf16.mxu0 0
      %925 = vmatpush1.bf16.msra.mxu0 %v899
      %926 = vmatprep.subr.bf16.mxu0 0
      %927 = vmatpush1.bf16.msra.mxu0 %v898
      %928 = vmatprep.subr.bf16.mxu0 0
      %929 = vmatpush2.bf16.msra.mxu0 0
      %930 = vmatprep.subr.bf16.mxu0 0
      %931 = vmatpush2.bf16.msra.mxu0 0
      %932 = vmatprep.subr.bf16.mxu0 0
      %933 = vmatpush2.bf16.msra.mxu0 0
      %934 = vmatprep.subr.bf16.mxu0 0
      %935 = vmatpush2.bf16.msra.mxu0 0
      %936 = vmatprep.subr.bf16.mxu0 0
      %937 = vmatpush2.bf16.msra.mxu0 0
      %938 = vmatprep.subr.bf16.mxu0 0
      %939 = vmatpush2.bf16.msra.mxu0 0
      %940 = vmatprep.subr.bf16.mxu0 0
      %941 = vmatpush2.bf16.msra.mxu0 0
      %942 = vmatprep.subr.bf16.mxu0 0
      %943 = vmatpush2.bf16.msra.mxu0 0
      %944 = vmatprep.mubr.bf16.mxu0 0
      %945 = vmatmul.mubr.bf16.gmra.mxu0 %v907
      %v946 = vpop.f32.mrf.mxu0
      %v947 = vadd.f32 %v880, %v946
      %v948 = vpop.f32.mrf.mxu0
      %v949 = vpop.f32.mrf.mxu0
      %v950 = vadd.f32 %v880, %v949
      %v951 = vpop.f32.mrf.mxu0
      %952 = vmatprep.mubr.bf16.mxu0 0
      %953 = vmatmul.mubr.bf16.gmra.mxu0 %v910
      %v954 = vpop.f32.mrf.mxu0
      %v955 = vadd.f32 %v880, %v954
      %v956 = vpop.f32.mrf.mxu0
      %v957 = vpop.f32.mrf.mxu0
      %v958 = vadd.f32 %v880, %v957
      %v959 = vpop.f32.mrf.mxu0
      %960 = vdwg.mxu0
      %vm961 = vcmask 130048
      %962 = vst.msk [vmem:[%s283] sm:$0xff] %vm961, %v947
      %963 = vst.msk [vmem:[%s283 + $0x8] sm:$0xff] %vm961, %v950
      %964 = vst.msk [vmem:[%s283 + $0x10] sm:$0xff] %vm961, %v955
      %965 = vst.msk [vmem:[%s283 + $0x18] sm:$0xff] %vm961, %v958
      %s966 = smul.u32 4, %s18
      %p967 = scmp.lt.s32.totalorder %s966, 15
      %s968 = scalar_select %p967, %s966, 15
      %s969 = smul.addr %s968, 8
      %s970 = scalar_lea.vmem %s7, %s969
      // Predicated region
      $region49: #{tpu_custom_call.1} parent=47 // pred_check
        %p971 = pneg %p188
      $region50: #{tpu_custom_call.1} parent=47 // pred_check_branch
        %973 = sbr.rel (%p971) target = $region52
      $region51: #{tpu_custom_call.1} parent=47 // pred_region
        %s974 = smul.u32 4, %s18
      $region52: #{tpu_custom_call.1} parent=47 // pred_fallthru
        _
    $region48: #{tpu_custom_call.1} parent=5 // pred_fallthru
      _
    %p975 = scmp.le.s32.totalorder 2, %s13
    // Predicated region
    $region53: #{tpu_custom_call.1} parent=5 // pred_check
      %p976 = pneg %p975
    $region54: #{tpu_custom_call.1} parent=5 // pred_check_branch
      %978 = sbr.rel (%p976) target = $region56
    $region55: #{tpu_custom_call.1} parent=5 // pred_region
      %s979 = ssub.s32 %s13, 2
      // Predicated region
      $region57: #{tpu_custom_call.1} parent=55 // pred_check
        %p980 = pneg %p194
      $region58: #{tpu_custom_call.1} parent=55 // pred_check_branch
        %982 = sbr.rel (%p980) target = $region60
      $region59: #{tpu_custom_call.1} parent=55 // pred_region
        %s983 = smul.u32 4, %s19
        %p984 = scmp.lt.s32.totalorder %s983, 15
        %s985 = scalar_select %p984, %s983, 15
        %s986 = smul.addr %s985, 8
        %s987 = scalar_lea.vmem %s7, %s986
      $region60: #{tpu_custom_call.1} parent=55 // pred_fallthru
        _
    $region56: #{tpu_custom_call.1} parent=5 // pred_fallthru
      _
  $region6: #{tpu_custom_call.1} parent=0 // loop_footer
    %s17 = sadd.s32 1, %s13
  $region7: #{tpu_custom_call.1} parent=0 // loop_footer_branch
    %12 = sbr.rel target = $region3
  $region8: #{tpu_custom_call.1} parent=0 // loop_exit
    _

</llo_original>
